<compile_context>
chip_gen: v6e
topology: v6e:2x2x1
jax: 0.10.0
libtpu: 0.0.40
codegen_flags: <defaults>
</compile_context>

<pallas_src>
import jax
import jax.numpy as jnp
from jax.experimental import pallas as pl
from jax.experimental.pallas import tpu as pltpu


def net_cell_kernel(p_ref, x_ref, theta_ref, bias_h_ref, w_out_ref, b_out_ref, z_ref):
    # (tm, N) @ (N, F_in) -> (tm, F_in); bf16 operands, f32 accumulation (MXU)
    px = jnp.dot(p_ref[...], x_ref[...], preferred_element_type=jnp.float32)
    # (tm, F_in) @ (F_in, hid) + hconv bias -> (tm, hid), f32
    h = jnp.dot(px.astype(jnp.bfloat16), theta_ref[...],
                preferred_element_type=jnp.float32) + bias_h_ref[...]
    emb = jnp.maximum(h, 0.0)                                   # relu (VPU, f32)
    # (tm, hid) @ (hid, C_pad) + bias -> lane-dense (tm, 128k) f32 store
    z_ref[...] = jnp.dot(emb.astype(jnp.bfloat16), w_out_ref[...],
                         preferred_element_type=jnp.float32) + b_out_ref[...]


def precompute_propagation(edge_index, num_nodes, num_edges):
    """Graph-static precompute: dense incidence -> propagation matrix P (N, N)."""
    H = jnp.zeros((num_nodes, num_edges), jnp.float32)
    H = H.at[edge_index[0], edge_index[1]].add(1.0)
    D = H.sum(axis=1)                                   # node degrees
    B = H.sum(axis=0)                                   # hyperedge degrees
    Dinv = jnp.where(D > 0, 1.0 / D, 0.0)               # inf -> 0 fixup
    Binv = jnp.where(B > 0, 1.0 / B, 0.0)
    return (Dinv[:, None] * H) @ (H * Binv[None, :]).T  # (N, N)


def net_cell_forward(x, P, theta, bias_h, w_out, b_out, *, tm=128):
    """x:(N,64) f32, P:(N,N) f32 propagation matrix -> z:(N,num_of_class) f32."""
    N, f_in = x.shape
    hid, C = w_out.shape
    lanes = 128
    c_pad = ((C + lanes - 1) // lanes) * lanes          # lane-dense output width
    n_pad = ((N + tm - 1) // tm) * tm                   # row-tileable node count

    # bf16 matmul operands (accumulation is f32 inside the kernel); f32 biases.
    p_bf = jnp.pad(P, ((0, n_pad - N), (0, 0))).astype(jnp.bfloat16)          # (n_pad, N)
    x_bf = x.astype(jnp.bfloat16)                                             # (N, f_in)
    theta_bf = theta.astype(jnp.bfloat16)                                     # (f_in, hid)
    w_out_bf = jnp.pad(w_out, ((0, 0), (0, c_pad - C))).astype(jnp.bfloat16)  # (hid, c_pad)
    b_out_f = jnp.pad(b_out.reshape(1, C), ((0, 0), (0, c_pad - C))).astype(jnp.float32)
    bias_h_f = bias_h.reshape(1, hid).astype(jnp.float32)

    z_pad = pl.pallas_call(
        net_cell_kernel,
        out_shape=jax.ShapeDtypeStruct((n_pad, c_pad), jnp.float32),
        grid=(n_pad // tm,),
        in_specs=[
            pl.BlockSpec((tm, N), lambda i: (i, 0)),       # P row tile
            pl.BlockSpec((N, f_in), lambda i: (0, 0)),     # full X
            pl.BlockSpec((f_in, hid), lambda i: (0, 0)),   # Theta
            pl.BlockSpec((1, hid), lambda i: (0, 0)),      # hconv bias
            pl.BlockSpec((hid, c_pad), lambda i: (0, 0)),  # out weight (lane-padded)
            pl.BlockSpec((1, c_pad), lambda i: (0, 0)),    # out bias (lane-padded)
        ],
        out_specs=pl.BlockSpec((tm, c_pad), lambda i: (i, 0)),
        compiler_params=pltpu.CompilerParams(
            dimension_semantics=("parallel",),             # megacore split on v7x
        ),
    )(p_bf, x_bf, theta_bf, bias_h_f, w_out_bf, b_out_f)

    return z_pad[:N, :C]


if __name__ == "__main__":
    N, E = 256, 64           # nodes, hyperedges (small demo sizes)
    F_IN, HID = 64, 32       # HypergraphConv(64, 32)
    NUM_CLASS = 4

    key = jax.random.PRNGKey(0)
    kx, kt, kb, kw, kbo = jax.random.split(key, 5)

    # deterministic inputs / parameters
    x = jax.random.normal(kx, (N, F_IN), jnp.float32)

    # hypergraph: hyperedge e contains nodes {4e, 4e+1, 4e+2, 4e+3} mod N
    edge_nodes = (jnp.arange(E)[:, None] * 4 + jnp.arange(4)[None, :]) % N   # (E, 4)
    edge_ids = jnp.broadcast_to(jnp.arange(E)[:, None], (E, 4))
    edge_index = jnp.stack([edge_nodes.reshape(-1), edge_ids.reshape(-1)]).astype(jnp.int32)

    # HypergraphConv.lin : Linear(64, 32, bias=False)
    theta = jax.random.normal(kt, (F_IN, HID), jnp.float32) * (1.0 / jnp.sqrt(F_IN))
    # HypergraphConv.bias : (HID,)
    bias_h = jax.random.normal(kb, (HID,), jnp.float32) * 0.01
    # GNN.out : Linear(32, NUM_CLASS)
    w_out = jax.random.normal(kw, (HID, NUM_CLASS), jnp.float32) * (1.0 / jnp.sqrt(HID))
    b_out = jax.random.normal(kbo, (NUM_CLASS,), jnp.float32) * 0.01

    # graph-static precompute (hoisted out of the per-forward kernel)
    P = precompute_propagation(edge_index, N, E)

    z = net_cell_forward(x, P, theta, bias_h, w_out, b_out, tm=128)
    jax.block_until_ready(z)

    # f32 reference (same math as PyG HypergraphConv no-attention + Linear)
    H = jnp.zeros((N, E), jnp.float32).at[edge_index[0], edge_index[1]].add(1.0)
    xp = x @ theta
    Bdeg = H.sum(0); Binv = jnp.where(Bdeg > 0, 1.0 / Bdeg, 0.0)
    Ddeg = H.sum(1); Dinv = jnp.where(Ddeg > 0, 1.0 / Ddeg, 0.0)
    h_ref = Dinv[:, None] * (H @ (Binv[:, None] * (H.T @ xp))) + bias_h[None, :]
    z_ref = jnp.maximum(h_ref, 0.0) @ w_out + b_out[None, :]

    assert z.shape == (N, NUM_CLASS)
    # bf16 matmul operands -> allow ~1% numerical slack vs. the f32 reference
    assert jnp.allclose(z, z_ref, atol=5e-2, rtol=5e-2), float(jnp.max(jnp.abs(z - z_ref)))

    print("KERNEL_OK")
</pallas_src>

<mosaic_0001>
module attributes {stable_mosaic.version = 11 : i64} {
  func.func @net_cell_kernel(%arg0: i32, %arg1: memref<128x256xbf16, #tpu.memory_space<vmem>>, %arg2: memref<256x64xbf16, #tpu.memory_space<vmem>>, %arg3: memref<64x32xbf16, #tpu.memory_space<vmem>>, %arg4: memref<1x32xf32, #tpu.memory_space<vmem>>, %arg5: memref<32x128xbf16, #tpu.memory_space<vmem>>, %arg6: memref<1x128xf32, #tpu.memory_space<vmem>>, %arg7: memref<128x128xf32, #tpu.memory_space<vmem>>) attributes {dimension_semantics = [#tpu.dimension_semantics<parallel>], iteration_bounds = array<i64: 2>, scalar_prefetch = 0 : i64, scratch_operands = 0 : i64, tpu.core_type = #tpu.core_type<tc>, window_params = [{transform_indices = @transform_0, window_bounds = array<i64: 128, 256>}, {pipeline_mode = #tpu.pipeline_mode<synchronous>, transform_indices = @transform_1, window_bounds = array<i64: 256, 64>}, {pipeline_mode = #tpu.pipeline_mode<synchronous>, transform_indices = @transform_2, window_bounds = array<i64: 64, 32>}, {pipeline_mode = #tpu.pipeline_mode<synchronous>, transform_indices = @transform_3, window_bounds = array<i64: 1, 32>}, {pipeline_mode = #tpu.pipeline_mode<synchronous>, transform_indices = @transform_4, window_bounds = array<i64: 32, 128>}, {pipeline_mode = #tpu.pipeline_mode<synchronous>, transform_indices = @transform_5, window_bounds = array<i64: 1, 128>}, {transform_indices = @transform_6, window_bounds = array<i64: 128, 128>}]} {
    %c0 = arith.constant 0 : index
    %c0_0 = arith.constant 0 : index
    %0 = vector.load %arg1[%c0, %c0_0] : memref<128x256xbf16, #tpu.memory_space<vmem>>, vector<128x256xbf16>
    %c0_1 = arith.constant 0 : index
    %c0_2 = arith.constant 0 : index
    %1 = vector.load %arg2[%c0_1, %c0_2] : memref<256x64xbf16, #tpu.memory_space<vmem>>, vector<256x64xbf16>
    %cst = arith.constant dense<0.000000e+00> : vector<128x64xf32>
    %2 = tpu.matmul %0, %1, %cst {dimension_numbers = #tpu.dot_dimension_numbers<[1], [0], [0], [1], [0, 0, 1, 1], [], []>} : vector<128x256xbf16>, vector<256x64xbf16>, vector<128x64xf32> -> vector<128x64xf32>
    %3 = arith.truncf %2 : vector<128x64xf32> to vector<128x64xbf16>
    %c0_3 = arith.constant 0 : index
    %c0_4 = arith.constant 0 : index
    %4 = vector.load %arg3[%c0_3, %c0_4] : memref<64x32xbf16, #tpu.memory_space<vmem>>, vector<64x32xbf16>
    %cst_5 = arith.constant dense<0.000000e+00> : vector<128x32xf32>
    %5 = tpu.matmul %3, %4, %cst_5 {dimension_numbers = #tpu.dot_dimension_numbers<[1], [0], [0], [1], [0, 0, 1, 1], [], []>} : vector<128x64xbf16>, vector<64x32xbf16>, vector<128x32xf32> -> vector<128x32xf32>
    %c0_6 = arith.constant 0 : index
    %c0_7 = arith.constant 0 : index
    %6 = vector.load %arg4[%c0_6, %c0_7] : memref<1x32xf32, #tpu.memory_space<vmem>>, vector<1x32xf32>
    %7 = vector.broadcast %6 : vector<1x32xf32> to vector<128x32xf32>
    %8 = arith.addf %5, %7 : vector<128x32xf32>
    %cst_8 = arith.constant 0.000000e+00 : f32
    %9 = vector.broadcast %cst_8 : f32 to vector<128x32xf32>
    %10 = arith.maximumf %8, %9 : vector<128x32xf32>
    %11 = arith.truncf %10 : vector<128x32xf32> to vector<128x32xbf16>
    %c0_9 = arith.constant 0 : index
    %c0_10 = arith.constant 0 : index
    %12 = vector.load %arg5[%c0_9, %c0_10] : memref<32x128xbf16, #tpu.memory_space<vmem>>, vector<32x128xbf16>
    %cst_11 = arith.constant dense<0.000000e+00> : vector<128x128xf32>
    %13 = tpu.matmul %11, %12, %cst_11 {dimension_numbers = #tpu.dot_dimension_numbers<[1], [0], [0], [1], [0, 0, 1, 1], [], []>} : vector<128x32xbf16>, vector<32x128xbf16>, vector<128x128xf32> -> vector<128x128xf32>
    %c0_12 = arith.constant 0 : index
    %c0_13 = arith.constant 0 : index
    %14 = vector.load %arg6[%c0_12, %c0_13] : memref<1x128xf32, #tpu.memory_space<vmem>>, vector<1x128xf32>
    %15 = vector.broadcast %14 : vector<1x128xf32> to vector<128x128xf32>
    %16 = arith.addf %13, %15 : vector<128x128xf32>
    %c0_14 = arith.constant 0 : index
    %c0_15 = arith.constant 0 : index
    %17 = vector.load %arg7[%c0_14, %c0_15] : memref<128x128xf32, #tpu.memory_space<vmem>>, vector<128x128xf32>
    tpu.vector_store %arg7[%c0_14, %c0_15], %16 {strides = array<i32>} : memref<128x128xf32, #tpu.memory_space<vmem>>, vector<128x128xf32>,
    return
  }
  func.func @transform_0(%arg0: i32) -> (i32, i32) {
    %c0_i32 = arith.constant 0 : i32
    %c0_i32_0 = arith.constant 0 : i32
    return %arg0, %c0_i32 : i32, i32
  }
  func.func @transform_1(%arg0: i32) -> (i32, i32) {
    %c0_i32 = arith.constant 0 : i32
    %c0_i32_0 = arith.constant 0 : i32
    %c0_i32_1 = arith.constant 0 : i32
    return %c0_i32, %c0_i32_0 : i32, i32
  }
  func.func @transform_2(%arg0: i32) -> (i32, i32) {
    %c0_i32 = arith.constant 0 : i32
    %c0_i32_0 = arith.constant 0 : i32
    %c0_i32_1 = arith.constant 0 : i32
    return %c0_i32, %c0_i32_0 : i32, i32
  }
  func.func @transform_3(%arg0: i32) -> (i32, i32) {
    %c0_i32 = arith.constant 0 : i32
    %c0_i32_0 = arith.constant 0 : i32
    %c0_i32_1 = arith.constant 0 : i32
    return %c0_i32, %c0_i32_0 : i32, i32
  }
  func.func @transform_4(%arg0: i32) -> (i32, i32) {
    %c0_i32 = arith.constant 0 : i32
    %c0_i32_0 = arith.constant 0 : i32
    %c0_i32_1 = arith.constant 0 : i32
    return %c0_i32, %c0_i32_0 : i32, i32
  }
  func.func @transform_5(%arg0: i32) -> (i32, i32) {
    %c0_i32 = arith.constant 0 : i32
    %c0_i32_0 = arith.constant 0 : i32
    %c0_i32_1 = arith.constant 0 : i32
    return %c0_i32, %c0_i32_0 : i32, i32
  }
  func.func @transform_6(%arg0: i32) -> (i32, i32) {
    %c0_i32 = arith.constant 0 : i32
    %c0_i32_0 = arith.constant 0 : i32
    return %arg0, %c0_i32 : i32, i32
  }
}

</mosaic_0001>

<llo_original>
// kernel: tpu_custom_call.1
$region0: #{tpu_custom_call.1}
  #allocation0 [shape = 'u32[]', space=smem, size = 0x4, offset = 0x4, fixed_abs, tag = 'smem constant byte address 0x4 - core index']
  #allocation1 [shape = 'u32[144,128]{1,0:T(1,128)}', space=vmem, size = 0x12000, scoped, tag = 'internal scratch']
  %s0 = inlined_call_operand.hbm [shape: bf16[256,256], index: 0, kind: input, shape index: {}]
  %s1 = inlined_call_operand.vmem [shape: bf16[256,64], index: 1, kind: input, shape index: {}]
  %s2 = inlined_call_operand.vmem [shape: bf16[64,32], index: 2, kind: input, shape index: {}]
  %s3 = inlined_call_operand.vmem [shape: f32[1,32], index: 3, kind: input, shape index: {}]
  %s4 = inlined_call_operand.vmem [shape: bf16[32,128], index: 4, kind: input, shape index: {}]
  %s5 = inlined_call_operand.vmem [shape: f32[1,128], index: 5, kind: input, shape index: {}]
  %s6 = inlined_call_operand.hbm [shape: f32[256,128], index: 6, kind: output, shape index: {}]
  %s7 = sld [smem:[#allocation0]]
  $region61: #{tpu_custom_call.1} parent=0
    _
  %s9 = ssub.s32 1, %s7
  %s10 = scalar_select 0, %s9, %s7
  $region1: #{tpu_custom_call.1} parent=0
    #allocation2 [shape = 'u8[131072]{0}', space=vmem, size = 0x20000, scoped, tag = 'input window, operand 0']
    #allocation3 [shape = 's32[2]{0}', space=sflag, size = 0x8, scoped, tag = 'scoped memory for tpu_custom_call.1']
    #allocation4 [shape = 's32[2]{0}', space=sflag, size = 0x8, scoped, tag = 'scoped memory for tpu_custom_call.1']
    #allocation5 [shape = 'u8[131072]{0}', space=vmem, size = 0x20000, scoped, tag = 'output window, operand 0']
    %11 = vsyncpa [#allocation3], 0
    %s12 = scalar_lea.sflag [#allocation3], 1
    %13 = vsyncpa %s12, 0
    %14 = vsyncpa [#allocation4], 0
    %s15 = scalar_lea.sflag [#allocation4], 1
    %16 = vsyncpa %s15, 0
    loop: start=0, step=1, limit=4
    $region2: #{tpu_custom_call.1} parent=1 // loop_pre_header
      _
    $region3: #{tpu_custom_call.1} parent=1 // loop_header
      %s18 = sphi 0, %s22
      %p19 = scmp.ge.s32.totalorder %s18, 4
      %s28 = sphi 0, %s30
      %s31 = sphi 0, %s28
      %s32 = sphi 0, %s31
      %s48 = sphi 0, %s32
      %s52 = sphi 0, %s52
      %s54 = sphi 0, %s52
      %s55 = sphi 0, %s54
      %s69 = sphi 0, %s55
      %s73 = sphi 0, %s73
      %s75 = sphi 0, %s73
      %s76 = sphi 0, %s75
      %s90 = sphi 0, %s76
      %s94 = sphi 0, %s94
      %s96 = sphi 0, %s94
      %s97 = sphi 0, %s96
      %s111 = sphi 0, %s97
      %s115 = sphi 0, %s115
      %s117 = sphi 0, %s115
      %s118 = sphi 0, %s117
      %s132 = sphi 0, %s118
      %s136 = sphi 0, %s136
      %s138 = sphi 0, %s136
      %s139 = sphi 0, %s138
      %s153 = sphi 0, %s139
      %s159 = sphi 0, %s161
      %s162 = sphi 0, %s159
      %s163 = sphi 0, %s162
      %s179 = sphi 0, %s163
    $region4: #{tpu_custom_call.1} parent=1 // loop_header_branch
      %21 = sbr.rel (%p19) target = $region8
    $region5: #{tpu_custom_call.1} parent=1 // loop_body
      %s23 = ssub.s32 %s18, 1
      %s24 = ssub.s32 %s18, 2
      %s25 = sadd.s32 %s18, 1
      %s26 = ssub.s32 %s18, %s25
      %p27 = scmp.eq.s32.totalorder %s26, 0
      %s29 = sadd.s32 %s28, 1
      %s30 = scalar_select %p27, %s28, %s29
      %p33 = pneg %p27
      %p34 = scmp.eq.s32.totalorder %s18, 1
      %p35 = por %p33, %p34
      %p36 = scmp.ne.s32.totalorder %s28, %s31
      %p37 = scmp.eq.s32.totalorder %s18, 0
      %p38 = por %p36, %p37
      %p39 = scmp.ne.s32.totalorder %s28, %s31
      %p40 = scmp.eq.s32.totalorder %s23, 1
      %p41 = por %p39, %p40
      %p42 = scmp.ne.s32.totalorder %s31, %s32
      %p43 = scmp.eq.s32.totalorder %s23, 0
      %p44 = por %p42, %p43
      %p45 = scmp.ne.s32.totalorder %s31, %s32
      %p46 = scmp.eq.s32.totalorder %s24, 1
      %p47 = por %p45, %p46
      %p49 = scmp.ne.s32.totalorder %s32, %s48
      %p50 = scmp.eq.s32.totalorder %s24, 0
      %p51 = por %p49, %p50
      %s53 = sadd.s32 %s52, 1
      %p56 = scmp.eq.s32.totalorder %s18, 1
      %p57 = scmp.ne.s32.totalorder %s52, %s54
      %p58 = scmp.eq.s32.totalorder %s18, 0
      %p59 = por %p57, %p58
      %p60 = scmp.ne.s32.totalorder %s52, %s54
      %p61 = scmp.eq.s32.totalorder %s23, 1
      %p62 = por %p60, %p61
      %p63 = scmp.ne.s32.totalorder %s54, %s55
      %p64 = scmp.eq.s32.totalorder %s23, 0
      %p65 = por %p63, %p64
      %p66 = scmp.ne.s32.totalorder %s54, %s55
      %p67 = scmp.eq.s32.totalorder %s24, 1
      %p68 = por %p66, %p67
      %p70 = scmp.ne.s32.totalorder %s55, %s69
      %p71 = scmp.eq.s32.totalorder %s24, 0
      %p72 = por %p70, %p71
      %s74 = sadd.s32 %s73, 1
      %p77 = scmp.eq.s32.totalorder %s18, 1
      %p78 = scmp.ne.s32.totalorder %s73, %s75
      %p79 = scmp.eq.s32.totalorder %s18, 0
      %p80 = por %p78, %p79
      %p81 = scmp.ne.s32.totalorder %s73, %s75
      %p82 = scmp.eq.s32.totalorder %s23, 1
      %p83 = por %p81, %p82
      %p84 = scmp.ne.s32.totalorder %s75, %s76
      %p85 = scmp.eq.s32.totalorder %s23, 0
      %p86 = por %p84, %p85
      %p87 = scmp.ne.s32.totalorder %s75, %s76
      %p88 = scmp.eq.s32.totalorder %s24, 1
      %p89 = por %p87, %p88
      %p91 = scmp.ne.s32.totalorder %s76, %s90
      %p92 = scmp.eq.s32.totalorder %s24, 0
      %p93 = por %p91, %p92
      %s95 = sadd.s32 %s94, 1
      %p98 = scmp.eq.s32.totalorder %s18, 1
      %p99 = scmp.ne.s32.totalorder %s94, %s96
      %p100 = scmp.eq.s32.totalorder %s18, 0
      %p101 = por %p99, %p100
      %p102 = scmp.ne.s32.totalorder %s94, %s96
      %p103 = scmp.eq.s32.totalorder %s23, 1
      %p104 = por %p102, %p103
      %p105 = scmp.ne.s32.totalorder %s96, %s97
      %p106 = scmp.eq.s32.totalorder %s23, 0
      %p107 = por %p105, %p106
      %p108 = scmp.ne.s32.totalorder %s96, %s97
      %p109 = scmp.eq.s32.totalorder %s24, 1
      %p110 = por %p108, %p109
      %p112 = scmp.ne.s32.totalorder %s97, %s111
      %p113 = scmp.eq.s32.totalorder %s24, 0
      %p114 = por %p112, %p113
      %s116 = sadd.s32 %s115, 1
      %p119 = scmp.eq.s32.totalorder %s18, 1
      %p120 = scmp.ne.s32.totalorder %s115, %s117
      %p121 = scmp.eq.s32.totalorder %s18, 0
      %p122 = por %p120, %p121
      %p123 = scmp.ne.s32.totalorder %s115, %s117
      %p124 = scmp.eq.s32.totalorder %s23, 1
      %p125 = por %p123, %p124
      %p126 = scmp.ne.s32.totalorder %s117, %s118
      %p127 = scmp.eq.s32.totalorder %s23, 0
      %p128 = por %p126, %p127
      %p129 = scmp.ne.s32.totalorder %s117, %s118
      %p130 = scmp.eq.s32.totalorder %s24, 1
      %p131 = por %p129, %p130
      %p133 = scmp.ne.s32.totalorder %s118, %s132
      %p134 = scmp.eq.s32.totalorder %s24, 0
      %p135 = por %p133, %p134
      %s137 = sadd.s32 %s136, 1
      %p140 = scmp.eq.s32.totalorder %s18, 1
      %p141 = scmp.ne.s32.totalorder %s136, %s138
      %p142 = scmp.eq.s32.totalorder %s18, 0
      %p143 = por %p141, %p142
      %p144 = scmp.ne.s32.totalorder %s136, %s138
      %p145 = scmp.eq.s32.totalorder %s23, 1
      %p146 = por %p144, %p145
      %p147 = scmp.ne.s32.totalorder %s138, %s139
      %p148 = scmp.eq.s32.totalorder %s23, 0
      %p149 = por %p147, %p148
      %p150 = scmp.ne.s32.totalorder %s138, %s139
      %p151 = scmp.eq.s32.totalorder %s24, 1
      %p152 = por %p150, %p151
      %p154 = scmp.ne.s32.totalorder %s139, %s153
      %p155 = scmp.eq.s32.totalorder %s24, 0
      %p156 = por %p154, %p155
      %s157 = ssub.s32 %s18, %s25
      %p158 = scmp.eq.s32.totalorder %s157, 0
      %s160 = sadd.s32 %s159, 1
      %s161 = scalar_select %p158, %s159, %s160
      %p164 = pneg %p158
      %p165 = scmp.eq.s32.totalorder %s18, 1
      %p166 = por %p164, %p165
      %p167 = scmp.ne.s32.totalorder %s159, %s162
      %p168 = scmp.eq.s32.totalorder %s18, 0
      %p169 = por %p167, %p168
      %p170 = scmp.ne.s32.totalorder %s159, %s162
      %p171 = scmp.eq.s32.totalorder %s23, 1
      %p172 = por %p170, %p171
      %p173 = scmp.ne.s32.totalorder %s162, %s163
      %p174 = scmp.eq.s32.totalorder %s23, 0
      %p175 = por %p173, %p174
      %p176 = scmp.ne.s32.totalorder %s162, %s163
      %p177 = scmp.eq.s32.totalorder %s24, 1
      %p178 = por %p176, %p177
      %p180 = scmp.ne.s32.totalorder %s163, %s179
      %p181 = scmp.eq.s32.totalorder %s24, 0
      %p182 = por %p180, %p181
      %p183 = scmp.le.s32.totalorder 1, %s18
      %p184 = scmp.lt.s32.totalorder %s18, 3
      %p185 = pnand %p183, %p184
      %p186 = pneg %p185
      // Predicated region
      $region9: #{tpu_custom_call.1} parent=5 // pred_check
        _
      $region10: #{tpu_custom_call.1} parent=5 // pred_check_branch
        %188 = sbr.rel (%p185) target = $region12
      $region11: #{tpu_custom_call.1} parent=5 // pred_region
        %s189 = ssub.s32 %s18, 1
        // Predicated region
        $region13: #{tpu_custom_call.1} parent=11 // pred_check
          %p190 = pneg %p65
        $region14: #{tpu_custom_call.1} parent=11 // pred_check_branch
          %192 = sbr.rel (%p190) target = $region16
        $region15: #{tpu_custom_call.1} parent=11 // pred_region
          _
        $region16: #{tpu_custom_call.1} parent=11 // pred_fallthru
          _
        // Predicated region
        $region17: #{tpu_custom_call.1} parent=11 // pred_check
          %p193 = pneg %p86
        $region18: #{tpu_custom_call.1} parent=11 // pred_check_branch
          %195 = sbr.rel (%p193) target = $region20
        $region19: #{tpu_custom_call.1} parent=11 // pred_region
          _
        $region20: #{tpu_custom_call.1} parent=11 // pred_fallthru
          _
        // Predicated region
        $region21: #{tpu_custom_call.1} parent=11 // pred_check
          %p196 = pneg %p107
        $region22: #{tpu_custom_call.1} parent=11 // pred_check_branch
          %198 = sbr.rel (%p196) target = $region24
        $region23: #{tpu_custom_call.1} parent=11 // pred_region
          _
        $region24: #{tpu_custom_call.1} parent=11 // pred_fallthru
          _
        // Predicated region
        $region25: #{tpu_custom_call.1} parent=11 // pred_check
          %p199 = pneg %p128
        $region26: #{tpu_custom_call.1} parent=11 // pred_check_branch
          %201 = sbr.rel (%p199) target = $region28
        $region27: #{tpu_custom_call.1} parent=11 // pred_region
          _
        $region28: #{tpu_custom_call.1} parent=11 // pred_fallthru
          _
        // Predicated region
        $region29: #{tpu_custom_call.1} parent=11 // pred_check
          %p202 = pneg %p149
        $region30: #{tpu_custom_call.1} parent=11 // pred_check_branch
          %204 = sbr.rel (%p202) target = $region32
        $region31: #{tpu_custom_call.1} parent=11 // pred_region
          _
        $region32: #{tpu_custom_call.1} parent=11 // pred_fallthru
          _
      $region12: #{tpu_custom_call.1} parent=5 // pred_fallthru
        _
      %p205 = scmp.lt.s32.totalorder %s18, 2
      // Predicated region
      $region33: #{tpu_custom_call.1} parent=5 // pred_check
        %p206 = pneg %p205
      $region34: #{tpu_custom_call.1} parent=5 // pred_check_branch
        %208 = sbr.rel (%p206) target = $region36
      $region35: #{tpu_custom_call.1} parent=5 // pred_region
        // Predicated region
        $region37: #{tpu_custom_call.1} parent=35 // pred_check
          %p209 = pneg %p38
        $region38: #{tpu_custom_call.1} parent=35 // pred_check_branch
          %211 = sbr.rel (%p209) target = $region40
        $region39: #{tpu_custom_call.1} parent=35 // pred_region
          %s212 = sand.u32 %s28, 1
          %s213 = scalar_lea.sflag [#allocation3], %s212
          %s214 = sand.u32 %s28, 1
          %s215 = smul.addr %s214, 128
          %s216 = scalar_lea.vmem [#allocation2], %s215
          %s217 = smul.u32 16, %s18
          %s219 = ssub.s32 2048, 2048
          %220 = vsyncadd %s213, %s219
          %s221 = smul.addr %s217, 2
          %s222 = smul.addr %s221, 64
          %s223 = scalar_lea.hbm %s0, %s222
          %s224 = sshll.u32 %s216, 4
          %s225 = int_to_ptr.vmem [resolvable:$true] %s224
          %230 = dma.hbm_to_vmem [thread:$0]  %s223, 2048, %s225, %s213, 128, 128, 8
        $region40: #{tpu_custom_call.1} parent=35 // pred_fallthru
          _
      $region36: #{tpu_custom_call.1} parent=5 // pred_fallthru
        _
      %p231 = scmp.le.s32.totalorder 1, %s18
      %p232 = scmp.lt.s32.totalorder %s18, 3
      %p233 = pnand %p231, %p232
      %p234 = pneg %p233
      // Predicated region
      $region41: #{tpu_custom_call.1} parent=5 // pred_check
        _
      $region42: #{tpu_custom_call.1} parent=5 // pred_check_branch
        %236 = sbr.rel (%p233) target = $region44
      $region43: #{tpu_custom_call.1} parent=5 // pred_region
        %s237 = ssub.s32 %s18, 1
        %s238 = sand.u32 %s31, 1
        %s239 = scalar_lea.sflag [#allocation3], %s238
        %s240 = sand.u32 %s31, 1
        %s241 = smul.addr %s240, 128
        %s242 = scalar_lea.vmem [#allocation2], %s241
        // Predicated region
        $region45: #{tpu_custom_call.1} parent=43 // pred_check
          %p243 = pneg %p44
        $region46: #{tpu_custom_call.1} parent=43 // pred_check_branch
          %245 = sbr.rel (%p243) target = $region48
        $region47: #{tpu_custom_call.1} parent=43 // pred_region
          %246 = dma.done %s239, 2048
        $region48: #{tpu_custom_call.1} parent=43 // pred_fallthru
          _
        %s247 = sand.u32 %s31, 1
        %s248 = scalar_lea.sflag [#allocation3], %s247
        %s249 = sand.u32 %s31, 1
        %s250 = smul.addr %s249, 128
        %s251 = scalar_lea.vmem [#allocation2], %s250
        %p252 = pneg %p44
        %p253 = pneg %p41
        %p254 = pneg %p65
        %p255 = pneg %p62
        %p256 = pneg %p86
        %p257 = pneg %p83
        %p258 = pneg %p107
        %p259 = pneg %p104
        %p260 = pneg %p128
        %p261 = pneg %p125
        %p262 = pneg %p149
        %p263 = pneg %p146
        %p264 = pneg %p175
        %p265 = pneg %p172
        %s266 = sand.u32 %s162, 1
        %s267 = scalar_lea.sflag [#allocation4], %s266
        %s268 = sand.u32 %s162, 1
        %s269 = smul.addr %s268, 128
        %s270 = scalar_lea.vmem [#allocation5], %s269
        %s271 = smul.u32 16, %s23
        %s272 = smul.u32 16, %s23
        %v274 = vld [vmem:[%s242] sm:$0xff]
        %v275 = vld [vmem:[%s242 + $0x8] sm:$0xff]
        %v276 = vld [vmem:[%s242 + $0x10] sm:$0xff]
        %v277 = vld [vmem:[%s242 + $0x18] sm:$0xff]
        %v278 = vld [vmem:[%s242 + $0x20] sm:$0xff]
        %v279 = vld [vmem:[%s242 + $0x28] sm:$0xff]
        %v280 = vld [vmem:[%s242 + $0x30] sm:$0xff]
        %v281 = vld [vmem:[%s242 + $0x38] sm:$0xff]
        %v282 = vld [vmem:[%s242 + $0x40] sm:$0xff]
        %v283 = vld [vmem:[%s242 + $0x48] sm:$0xff]
        %v284 = vld [vmem:[%s242 + $0x50] sm:$0xff]
        %v285 = vld [vmem:[%s242 + $0x58] sm:$0xff]
        %v286 = vld [vmem:[%s242 + $0x60] sm:$0xff]
        %v287 = vld [vmem:[%s242 + $0x68] sm:$0xff]
        %v288 = vld [vmem:[%s242 + $0x70] sm:$0xff]
        %v289 = vld [vmem:[%s242 + $0x78] sm:$0xff]
        %v290 = vld [vmem:[%s1] sm:$0xf]
        %v291 = vld [vmem:[%s1 + $0x4] sm:$0xf]
        %v292 = vld [vmem:[%s1 + $0x8] sm:$0xf]
        %v293 = vld [vmem:[%s1 + $0xc] sm:$0xf]
        %v294 = vld [vmem:[%s1 + $0x10] sm:$0xf]
        %v295 = vld [vmem:[%s1 + $0x14] sm:$0xf]
        %v296 = vld [vmem:[%s1 + $0x18] sm:$0xf]
        %v297 = vld [vmem:[%s1 + $0x1c] sm:$0xf]
        %v298 = vld [vmem:[%s1 + $0x20] sm:$0xf]
        %v299 = vld [vmem:[%s1 + $0x24] sm:$0xf]
        %v300 = vld [vmem:[%s1 + $0x28] sm:$0xf]
        %v301 = vld [vmem:[%s1 + $0x2c] sm:$0xf]
        %v302 = vld [vmem:[%s1 + $0x30] sm:$0xf]
        %v303 = vld [vmem:[%s1 + $0x34] sm:$0xf]
        %v304 = vld [vmem:[%s1 + $0x38] sm:$0xf]
        %v305 = vld [vmem:[%s1 + $0x3c] sm:$0xf]
        %v306 = vld [vmem:[%s1 + $0x40] sm:$0xf]
        %v307 = vld [vmem:[%s1 + $0x44] sm:$0xf]
        %v308 = vld [vmem:[%s1 + $0x48] sm:$0xf]
        %v309 = vld [vmem:[%s1 + $0x4c] sm:$0xf]
        %v310 = vld [vmem:[%s1 + $0x50] sm:$0xf]
        %v311 = vld [vmem:[%s1 + $0x54] sm:$0xf]
        %v312 = vld [vmem:[%s1 + $0x58] sm:$0xf]
        %v313 = vld [vmem:[%s1 + $0x5c] sm:$0xf]
        %v314 = vld [vmem:[%s1 + $0x60] sm:$0xf]
        %v315 = vld [vmem:[%s1 + $0x64] sm:$0xf]
        %v316 = vld [vmem:[%s1 + $0x68] sm:$0xf]
        %v317 = vld [vmem:[%s1 + $0x6c] sm:$0xf]
        %v318 = vld [vmem:[%s1 + $0x70] sm:$0xf]
        %v319 = vld [vmem:[%s1 + $0x74] sm:$0xf]
        %v320 = vld [vmem:[%s1 + $0x78] sm:$0xf]
        %v321 = vld [vmem:[%s1 + $0x7c] sm:$0xf]
        %v338 = vunpack.c.l.b16 %v274
        %v339 = vunpack.c.h.b16 %v274
        %v340 = vunpack.c.l.b16 %v275
        %v341 = vunpack.c.h.b16 %v275
        %v342 = vunpack.c.l.b16 %v276
        %v343 = vunpack.c.h.b16 %v276
        %v344 = vunpack.c.l.b16 %v277
        %v345 = vunpack.c.h.b16 %v277
        %v346 = vunpack.c.l.b16 %v278
        %v347 = vunpack.c.h.b16 %v278
        %v348 = vunpack.c.l.b16 %v279
        %v349 = vunpack.c.h.b16 %v279
        %v350 = vunpack.c.l.b16 %v280
        %v351 = vunpack.c.h.b16 %v280
        %v352 = vunpack.c.l.b16 %v281
        %v353 = vunpack.c.h.b16 %v281
        %v354 = vunpack.c.l.b16 %v282
        %v355 = vunpack.c.h.b16 %v282
        %v356 = vunpack.c.l.b16 %v283
        %v357 = vunpack.c.h.b16 %v283
        %v358 = vunpack.c.l.b16 %v284
        %v359 = vunpack.c.h.b16 %v284
        %v360 = vunpack.c.l.b16 %v285
        %v361 = vunpack.c.h.b16 %v285
        %v362 = vunpack.c.l.b16 %v286
        %v363 = vunpack.c.h.b16 %v286
        %v364 = vunpack.c.l.b16 %v287
        %v365 = vunpack.c.h.b16 %v287
        %v366 = vunpack.c.l.b16 %v288
        %v367 = vunpack.c.h.b16 %v288
        %v368 = vunpack.c.l.b16 %v289
        %v369 = vunpack.c.h.b16 %v289
        %v370 = vpack.c.b16 %v340, %v338
        %v371 = vpack.c.b16 %v341, %v339
        %v372 = vpack.c.b16 %v344, %v342
        %v373 = vpack.c.b16 %v345, %v343
        %v374 = vpack.c.b16 %v348, %v346
        %v375 = vpack.c.b16 %v349, %v347
        %v376 = vpack.c.b16 %v352, %v350
        %v377 = vpack.c.b16 %v353, %v351
        %v378 = vpack.c.b16 %v356, %v354
        %v379 = vpack.c.b16 %v357, %v355
        %v380 = vpack.c.b16 %v360, %v358
        %v381 = vpack.c.b16 %v361, %v359
        %v382 = vpack.c.b16 %v364, %v362
        %v383 = vpack.c.b16 %v365, %v363
        %v384 = vpack.c.b16 %v368, %v366
        %v385 = vpack.c.b16 %v369, %v367
        %v434 = vunpack.c.l.b16 %v290
        %v435 = vunpack.c.l.b16 %v291
        %v436 = vunpack.c.l.b16 %v292
        %v437 = vunpack.c.l.b16 %v293
        %v438 = vunpack.c.l.b16 %v294
        %v439 = vunpack.c.l.b16 %v295
        %v440 = vunpack.c.l.b16 %v296
        %v441 = vunpack.c.l.b16 %v297
        %v442 = vunpack.c.l.b16 %v298
        %v443 = vunpack.c.l.b16 %v299
        %v444 = vunpack.c.l.b16 %v300
        %v445 = vunpack.c.l.b16 %v301
        %v446 = vunpack.c.l.b16 %v302
        %v447 = vunpack.c.l.b16 %v303
        %v448 = vunpack.c.l.b16 %v304
        %v449 = vunpack.c.l.b16 %v305
        %v450 = vunpack.c.l.b16 %v306
        %v451 = vunpack.c.l.b16 %v307
        %v452 = vunpack.c.l.b16 %v308
        %v453 = vunpack.c.l.b16 %v309
        %v454 = vunpack.c.l.b16 %v310
        %v455 = vunpack.c.l.b16 %v311
        %v456 = vunpack.c.l.b16 %v312
        %v457 = vunpack.c.l.b16 %v313
        %v458 = vunpack.c.l.b16 %v314
        %v459 = vunpack.c.l.b16 %v315
        %v460 = vunpack.c.l.b16 %v316
        %v461 = vunpack.c.l.b16 %v317
        %v462 = vunpack.c.l.b16 %v318
        %v463 = vunpack.c.l.b16 %v319
        %v464 = vunpack.c.l.b16 %v320
        %v465 = vunpack.c.l.b16 %v321
        %v466 = vpack.c.b16 %v435, %v434
        %v467 = vpack.c.b16 %v437, %v436
        %v468 = vpack.c.b16 %v439, %v438
        %v469 = vpack.c.b16 %v441, %v440
        %v470 = vpack.c.b16 %v443, %v442
        %v471 = vpack.c.b16 %v445, %v444
        %v472 = vpack.c.b16 %v447, %v446
        %v473 = vpack.c.b16 %v449, %v448
        %v474 = vpack.c.b16 %v451, %v450
        %v475 = vpack.c.b16 %v453, %v452
        %v476 = vpack.c.b16 %v455, %v454
        %v477 = vpack.c.b16 %v457, %v456
        %v478 = vpack.c.b16 %v459, %v458
        %v479 = vpack.c.b16 %v461, %v460
        %v480 = vpack.c.b16 %v463, %v462
        %v481 = vpack.c.b16 %v465, %v464
        %498 = vmatprep.subr.bf16.mxu0 0
        %499 = vmatpush1.bf16.msra.mxu0 %v473
        %500 = vmatprep.subr.bf16.mxu0 0
        %501 = vmatpush1.bf16.msra.mxu0 %v472
        %502 = vmatprep.subr.bf16.mxu0 0
        %503 = vmatpush1.bf16.msra.mxu0 %v471
        %504 = vmatprep.subr.bf16.mxu0 0
        %505 = vmatpush1.bf16.msra.mxu0 %v470
        %506 = vmatprep.subr.bf16.mxu0 0
        %507 = vmatpush1.bf16.msra.mxu0 %v469
        %508 = vmatprep.subr.bf16.mxu0 0
        %509 = vmatpush1.bf16.msra.mxu0 %v468
        %510 = vmatprep.subr.bf16.mxu0 0
        %511 = vmatpush1.bf16.msra.mxu0 %v467
        %512 = vmatprep.subr.bf16.mxu0 0
        %513 = vmatpush1.bf16.msra.mxu0 %v466
        %514 = vmatprep.subr.bf16.mxu0 0
        %515 = vmatpush2.bf16.msra.mxu0 %v481
        %516 = vmatprep.subr.bf16.mxu0 0
        %517 = vmatpush2.bf16.msra.mxu0 %v480
        %518 = vmatprep.subr.bf16.mxu0 0
        %519 = vmatpush2.bf16.msra.mxu0 %v479
        %520 = vmatprep.subr.bf16.mxu0 0
        %521 = vmatpush2.bf16.msra.mxu0 %v478
        %522 = vmatprep.subr.bf16.mxu0 0
        %523 = vmatpush2.bf16.msra.mxu0 %v477
        %524 = vmatprep.subr.bf16.mxu0 0
        %525 = vmatpush2.bf16.msra.mxu0 %v476
        %526 = vmatprep.subr.bf16.mxu0 0
        %527 = vmatpush2.bf16.msra.mxu0 %v475
        %528 = vmatprep.subr.bf16.mxu0 0
        %529 = vmatpush2.bf16.msra.mxu0 %v474
        %530 = vmatprep.mubr.bf16.mxu0 %v371
        %531 = vmatmul.mubr.bf16.gmra.mxu0 %v370
        %v532 = vpop.f32.mrf.mxu0
        %v533 = vadd.f32 0.0, %v532
        %v534 = vpop.f32.mrf.mxu0
        %v535 = vpop.f32.mrf.mxu0
        %v536 = vadd.f32 0.0, %v535
        %v537 = vpop.f32.mrf.mxu0
        %538 = vmatprep.mubr.bf16.mxu0 %v373
        %539 = vmatmul.mubr.bf16.gmra.mxu0 %v372
        %v540 = vpop.f32.mrf.mxu0
        %v541 = vadd.f32 0.0, %v540
        %v542 = vpop.f32.mrf.mxu0
        %v543 = vpop.f32.mrf.mxu0
        %v544 = vadd.f32 0.0, %v543
        %v545 = vpop.f32.mrf.mxu0
        %546 = vmatprep.mubr.bf16.mxu0 %v375
        %547 = vmatmul.mubr.bf16.gmra.mxu0 %v374
        %v548 = vpop.f32.mrf.mxu0
        %v549 = vadd.f32 0.0, %v548
        %v550 = vpop.f32.mrf.mxu0
        %v551 = vpop.f32.mrf.mxu0
        %v552 = vadd.f32 0.0, %v551
        %v553 = vpop.f32.mrf.mxu0
        %554 = vmatprep.mubr.bf16.mxu0 %v377
        %555 = vmatmul.mubr.bf16.gmra.mxu0 %v376
        %v556 = vpop.f32.mrf.mxu0
        %v557 = vadd.f32 0.0, %v556
        %v558 = vpop.f32.mrf.mxu0
        %v559 = vpop.f32.mrf.mxu0
        %v560 = vadd.f32 0.0, %v559
        %v561 = vpop.f32.mrf.mxu0
        %562 = vmatprep.mubr.bf16.mxu0 %v379
        %563 = vmatmul.mubr.bf16.gmra.mxu0 %v378
        %v564 = vpop.f32.mrf.mxu0
        %v565 = vadd.f32 0.0, %v564
        %v566 = vpop.f32.mrf.mxu0
        %v567 = vpop.f32.mrf.mxu0
        %v568 = vadd.f32 0.0, %v567
        %v569 = vpop.f32.mrf.mxu0
        %570 = vmatprep.mubr.bf16.mxu0 %v381
        %571 = vmatmul.mubr.bf16.gmra.mxu0 %v380
        %v572 = vpop.f32.mrf.mxu0
        %v573 = vadd.f32 0.0, %v572
        %v574 = vpop.f32.mrf.mxu0
        %v575 = vpop.f32.mrf.mxu0
        %v576 = vadd.f32 0.0, %v575
        %v577 = vpop.f32.mrf.mxu0
        %578 = vmatprep.mubr.bf16.mxu0 %v383
        %579 = vmatmul.mubr.bf16.gmra.mxu0 %v382
        %v580 = vpop.f32.mrf.mxu0
        %v581 = vadd.f32 0.0, %v580
        %v582 = vpop.f32.mrf.mxu0
        %v583 = vpop.f32.mrf.mxu0
        %v584 = vadd.f32 0.0, %v583
        %v585 = vpop.f32.mrf.mxu0
        %586 = vmatprep.mubr.bf16.mxu0 %v385
        %587 = vmatmul.mubr.bf16.gmra.mxu0 %v384
        %v588 = vpop.f32.mrf.mxu0
        %v589 = vadd.f32 0.0, %v588
        %v590 = vpop.f32.mrf.mxu0
        %v591 = vpop.f32.mrf.mxu0
        %v592 = vadd.f32 0.0, %v591
        %v593 = vpop.f32.mrf.mxu0
        %594 = vdwg.mxu0
        %v595 = vpack.c.bf16 %v536, %v533
        %v596 = vpack.c.bf16 %v544, %v541
        %v597 = vpack.c.bf16 %v552, %v549
        %v598 = vpack.c.bf16 %v560, %v557
        %v599 = vpack.c.bf16 %v568, %v565
        %v600 = vpack.c.bf16 %v576, %v573
        %v601 = vpack.c.bf16 %v584, %v581
        %v602 = vpack.c.bf16 %v592, %v589
        %v603 = vld [vmem:[%s2] sm:$0xf]
        %v604 = vld [vmem:[%s2 + $0x4] sm:$0xf]
        %v605 = vld [vmem:[%s2 + $0x8] sm:$0xf]
        %v606 = vld [vmem:[%s2 + $0xc] sm:$0xf]
        %v607 = vld [vmem:[%s2 + $0x10] sm:$0xf]
        %v608 = vld [vmem:[%s2 + $0x14] sm:$0xf]
        %v609 = vld [vmem:[%s2 + $0x18] sm:$0xf]
        %v610 = vld [vmem:[%s2 + $0x1c] sm:$0xf]
        %v611 = vld [vmem:[%s3] sm:$0x1]
        %v613 = vlaneseq
        %v614 = vshrl.u32 %v613, 7
        %v615 = vsub.s32 0, %v614
        %v616 = vrot.slane %v611, %v615
        %v626 = vunpack.c.l.b16 %v603
        %v627 = vunpack.c.l.b16 %v604
        %v628 = vunpack.c.l.b16 %v605
        %v629 = vunpack.c.l.b16 %v606
        %v630 = vunpack.c.l.b16 %v607
        %v631 = vunpack.c.l.b16 %v608
        %v632 = vunpack.c.l.b16 %v609
        %v633 = vunpack.c.l.b16 %v610
        %v634 = vpack.c.b16 %v627, %v626
        %v635 = vpack.c.b16 %v629, %v628
        %v636 = vpack.c.b16 %v631, %v630
        %v637 = vpack.c.b16 %v633, %v632
        %vm642 = vcmask 523264
        %v644 = vsel %vm642, %v595, 0
        %v647 = vsel %vm642, %v596, 0
        %v650 = vsel %vm642, %v597, 0
        %v653 = vsel %vm642, %v598, 0
        %v656 = vsel %vm642, %v599, 0
        %v659 = vsel %vm642, %v600, 0
        %v662 = vsel %vm642, %v601, 0
        %v665 = vsel %vm642, %v602, 0
        %667 = vmatprep.subr.bf16.mxu0 0
        %668 = vmatpush1.bf16.msra.mxu0 0
        %669 = vmatprep.subr.bf16.mxu0 0
        %670 = vmatpush1.bf16.msra.mxu0 0
        %671 = vmatprep.subr.bf16.mxu0 0
        %672 = vmatpush1.bf16.msra.mxu0 0
        %673 = vmatprep.subr.bf16.mxu0 0
        %674 = vmatpush1.bf16.msra.mxu0 0
        %675 = vmatprep.subr.bf16.mxu0 0
        %676 = vmatpush1.bf16.msra.mxu0 %v637
        %677 = vmatprep.subr.bf16.mxu0 0
        %678 = vmatpush1.bf16.msra.mxu0 %v636
        %679 = vmatprep.subr.bf16.mxu0 0
        %680 = vmatpush1.bf16.msra.mxu0 %v635
        %681 = vmatprep.subr.bf16.mxu0 0
        %682 = vmatpush1.bf16.msra.mxu0 %v634
        %683 = vmatprep.subr.bf16.mxu0 0
        %684 = vmatpush2.bf16.msra.mxu0 0
        %685 = vmatprep.subr.bf16.mxu0 0
        %686 = vmatpush2.bf16.msra.mxu0 0
        %687 = vmatprep.subr.bf16.mxu0 0
        %688 = vmatpush2.bf16.msra.mxu0 0
        %689 = vmatprep.subr.bf16.mxu0 0
        %690 = vmatpush2.bf16.msra.mxu0 0
        %691 = vmatprep.subr.bf16.mxu0 0
        %692 = vmatpush2.bf16.msra.mxu0 0
        %693 = vmatprep.subr.bf16.mxu0 0
        %694 = vmatpush2.bf16.msra.mxu0 0
        %695 = vmatprep.subr.bf16.mxu0 0
        %696 = vmatpush2.bf16.msra.mxu0 0
        %697 = vmatprep.subr.bf16.mxu0 0
        %698 = vmatpush2.bf16.msra.mxu0 0
        %699 = vmatprep.mubr.bf16.mxu0 0
        %700 = vmatmul.mubr.bf16.gmra.mxu0 %v644
        %v701 = vpop.f32.mrf.mxu0
        %v702 = vadd.f32 %v616, %v701
        %v703 = vpop.f32.mrf.mxu0
        %v704 = vpop.f32.mrf.mxu0
        %v705 = vadd.f32 %v616, %v704
        %v706 = vpop.f32.mrf.mxu0
        %707 = vmatprep.mubr.bf16.mxu0 0
        %708 = vmatmul.mubr.bf16.gmra.mxu0 %v647
        %v709 = vpop.f32.mrf.mxu0
        %v710 = vadd.f32 %v616, %v709
        %v711 = vpop.f32.mrf.mxu0
        %v712 = vpop.f32.mrf.mxu0
        %v713 = vadd.f32 %v616, %v712
        %v714 = vpop.f32.mrf.mxu0
        %715 = vmatprep.mubr.bf16.mxu0 0
        %716 = vmatmul.mubr.bf16.gmra.mxu0 %v650
        %v717 = vpop.f32.mrf.mxu0
        %v718 = vadd.f32 %v616, %v717
        %v719 = vpop.f32.mrf.mxu0
        %v720 = vpop.f32.mrf.mxu0
        %v721 = vadd.f32 %v616, %v720
        %v722 = vpop.f32.mrf.mxu0
        %723 = vmatprep.mubr.bf16.mxu0 0
        %724 = vmatmul.mubr.bf16.gmra.mxu0 %v653
        %v725 = vpop.f32.mrf.mxu0
        %v726 = vadd.f32 %v616, %v725
        %v727 = vpop.f32.mrf.mxu0
        %v728 = vpop.f32.mrf.mxu0
        %v729 = vadd.f32 %v616, %v728
        %v730 = vpop.f32.mrf.mxu0
        %731 = vmatprep.mubr.bf16.mxu0 0
        %732 = vmatmul.mubr.bf16.gmra.mxu0 %v656
        %v733 = vpop.f32.mrf.mxu0
        %v734 = vadd.f32 %v616, %v733
        %v735 = vpop.f32.mrf.mxu0
        %v736 = vpop.f32.mrf.mxu0
        %v737 = vadd.f32 %v616, %v736
        %v738 = vpop.f32.mrf.mxu0
        %739 = vmatprep.mubr.bf16.mxu0 0
        %740 = vmatmul.mubr.bf16.gmra.mxu0 %v659
        %v741 = vpop.f32.mrf.mxu0
        %v742 = vadd.f32 %v616, %v741
        %v743 = vpop.f32.mrf.mxu0
        %v744 = vpop.f32.mrf.mxu0
        %v745 = vadd.f32 %v616, %v744
        %v746 = vpop.f32.mrf.mxu0
        %747 = vmatprep.mubr.bf16.mxu0 0
        %748 = vmatmul.mubr.bf16.gmra.mxu0 %v662
        %v749 = vpop.f32.mrf.mxu0
        %v750 = vadd.f32 %v616, %v749
        %v751 = vpop.f32.mrf.mxu0
        %v752 = vpop.f32.mrf.mxu0
        %v753 = vadd.f32 %v616, %v752
        %v754 = vpop.f32.mrf.mxu0
        %755 = vmatprep.mubr.bf16.mxu0 0
        %756 = vmatmul.mubr.bf16.gmra.mxu0 %v665
        %v757 = vpop.f32.mrf.mxu0
        %v758 = vadd.f32 %v616, %v757
        %v759 = vpop.f32.mrf.mxu0
        %v760 = vpop.f32.mrf.mxu0
        %v761 = vadd.f32 %v616, %v760
        %v762 = vpop.f32.mrf.mxu0
        %763 = vdwg.mxu0
        %v764 = vmax.f32 %v702, 0.0
        %v765 = vmax.f32 %v705, 0.0
        %v766 = vmax.f32 %v710, 0.0
        %v767 = vmax.f32 %v713, 0.0
        %v768 = vmax.f32 %v718, 0.0
        %v769 = vmax.f32 %v721, 0.0
        %v770 = vmax.f32 %v726, 0.0
        %v771 = vmax.f32 %v729, 0.0
        %v772 = vmax.f32 %v734, 0.0
        %v773 = vmax.f32 %v737, 0.0
        %v774 = vmax.f32 %v742, 0.0
        %v775 = vmax.f32 %v745, 0.0
        %v776 = vmax.f32 %v750, 0.0
        %v777 = vmax.f32 %v753, 0.0
        %v778 = vmax.f32 %v758, 0.0
        %v779 = vmax.f32 %v761, 0.0
        %v780 = vpack.c.bf16 %v765, %v764
        %v781 = vpack.c.bf16 %v767, %v766
        %v782 = vpack.c.bf16 %v769, %v768
        %v783 = vpack.c.bf16 %v771, %v770
        %v784 = vpack.c.bf16 %v773, %v772
        %v785 = vpack.c.bf16 %v775, %v774
        %v786 = vpack.c.bf16 %v777, %v776
        %v787 = vpack.c.bf16 %v779, %v778
        %v788 = vld [vmem:[%s4] sm:$0xf]
        %v789 = vld [vmem:[%s4 + $0x4] sm:$0xf]
        %v790 = vld [vmem:[%s4 + $0x8] sm:$0xf]
        %v791 = vld [vmem:[%s4 + $0xc] sm:$0xf]
        %v792 = vld [vmem:[%s5] sm:$0x1]
        %v794 = vlaneseq
        %v795 = vshrl.u32 %v794, 7
        %v796 = vsub.s32 0, %v795
        %v797 = vrot.slane %v792, %v796
        %v803 = vunpack.c.l.b16 %v788
        %v804 = vunpack.c.l.b16 %v789
        %v805 = vunpack.c.l.b16 %v790
        %v806 = vunpack.c.l.b16 %v791
        %v807 = vpack.c.b16 %v804, %v803
        %v808 = vpack.c.b16 %v806, %v805
        %vm811 = vcmask 261120
        %v813 = vsel %vm811, %v780, 0
        %v816 = vsel %vm811, %v781, 0
        %v819 = vsel %vm811, %v782, 0
        %v822 = vsel %vm811, %v783, 0
        %v825 = vsel %vm811, %v784, 0
        %v828 = vsel %vm811, %v785, 0
        %v831 = vsel %vm811, %v786, 0
        %v834 = vsel %vm811, %v787, 0
        %836 = vmatprep.subr.bf16.mxu0 0
        %837 = vmatpush1.bf16.msra.mxu0 0
        %838 = vmatprep.subr.bf16.mxu0 0
        %839 = vmatpush1.bf16.msra.mxu0 0
        %840 = vmatprep.subr.bf16.mxu0 0
        %841 = vmatpush1.bf16.msra.mxu0 0
        %842 = vmatprep.subr.bf16.mxu0 0
        %843 = vmatpush1.bf16.msra.mxu0 0
        %844 = vmatprep.subr.bf16.mxu0 0
        %845 = vmatpush1.bf16.msra.mxu0 0
        %846 = vmatprep.subr.bf16.mxu0 0
        %847 = vmatpush1.bf16.msra.mxu0 0
        %848 = vmatprep.subr.bf16.mxu0 0
        %849 = vmatpush1.bf16.msra.mxu0 %v808
        %850 = vmatprep.subr.bf16.mxu0 0
        %851 = vmatpush1.bf16.msra.mxu0 %v807
        %852 = vmatprep.subr.bf16.mxu0 0
        %853 = vmatpush2.bf16.msra.mxu0 0
        %854 = vmatprep.subr.bf16.mxu0 0
        %855 = vmatpush2.bf16.msra.mxu0 0
        %856 = vmatprep.subr.bf16.mxu0 0
        %857 = vmatpush2.bf16.msra.mxu0 0
        %858 = vmatprep.subr.bf16.mxu0 0
        %859 = vmatpush2.bf16.msra.mxu0 0
        %860 = vmatprep.subr.bf16.mxu0 0
        %861 = vmatpush2.bf16.msra.mxu0 0
        %862 = vmatprep.subr.bf16.mxu0 0
        %863 = vmatpush2.bf16.msra.mxu0 0
        %864 = vmatprep.subr.bf16.mxu0 0
        %865 = vmatpush2.bf16.msra.mxu0 0
        %866 = vmatprep.subr.bf16.mxu0 0
        %867 = vmatpush2.bf16.msra.mxu0 0
        %868 = vmatprep.mubr.bf16.mxu0 0
        %869 = vmatmul.mubr.bf16.gmra.mxu0 %v813
        %v870 = vpop.f32.mrf.mxu0
        %v871 = vadd.f32 %v797, %v870
        %v872 = vpop.f32.mrf.mxu0
        %v873 = vpop.f32.mrf.mxu0
        %v874 = vadd.f32 %v797, %v873
        %v875 = vpop.f32.mrf.mxu0
        %876 = vmatprep.mubr.bf16.mxu0 0
        %877 = vmatmul.mubr.bf16.gmra.mxu0 %v816
        %v878 = vpop.f32.mrf.mxu0
        %v879 = vadd.f32 %v797, %v878
        %v880 = vpop.f32.mrf.mxu0
        %v881 = vpop.f32.mrf.mxu0
        %v882 = vadd.f32 %v797, %v881
        %v883 = vpop.f32.mrf.mxu0
        %884 = vmatprep.mubr.bf16.mxu0 0
        %885 = vmatmul.mubr.bf16.gmra.mxu0 %v819
        %v886 = vpop.f32.mrf.mxu0
        %v887 = vadd.f32 %v797, %v886
        %v888 = vpop.f32.mrf.mxu0
        %v889 = vpop.f32.mrf.mxu0
        %v890 = vadd.f32 %v797, %v889
        %v891 = vpop.f32.mrf.mxu0
        %892 = vmatprep.mubr.bf16.mxu0 0
        %893 = vmatmul.mubr.bf16.gmra.mxu0 %v822
        %v894 = vpop.f32.mrf.mxu0
        %v895 = vadd.f32 %v797, %v894
        %v896 = vpop.f32.mrf.mxu0
        %v897 = vpop.f32.mrf.mxu0
        %v898 = vadd.f32 %v797, %v897
        %v899 = vpop.f32.mrf.mxu0
        %900 = vmatprep.mubr.bf16.mxu0 0
        %901 = vmatmul.mubr.bf16.gmra.mxu0 %v825
        %v902 = vpop.f32.mrf.mxu0
        %v903 = vadd.f32 %v797, %v902
        %v904 = vpop.f32.mrf.mxu0
        %v905 = vpop.f32.mrf.mxu0
        %v906 = vadd.f32 %v797, %v905
        %v907 = vpop.f32.mrf.mxu0
        %908 = vmatprep.mubr.bf16.mxu0 0
        %909 = vmatmul.mubr.bf16.gmra.mxu0 %v828
        %v910 = vpop.f32.mrf.mxu0
        %v911 = vadd.f32 %v797, %v910
        %v912 = vpop.f32.mrf.mxu0
        %v913 = vpop.f32.mrf.mxu0
        %v914 = vadd.f32 %v797, %v913
        %v915 = vpop.f32.mrf.mxu0
        %916 = vmatprep.mubr.bf16.mxu0 0
        %917 = vmatmul.mubr.bf16.gmra.mxu0 %v831
        %v918 = vpop.f32.mrf.mxu0
        %v919 = vadd.f32 %v797, %v918
        %v920 = vpop.f32.mrf.mxu0
        %v921 = vpop.f32.mrf.mxu0
        %v922 = vadd.f32 %v797, %v921
        %v923 = vpop.f32.mrf.mxu0
        %924 = vmatprep.mubr.bf16.mxu0 0
        %925 = vmatmul.mubr.bf16.gmra.mxu0 %v834
        %v926 = vpop.f32.mrf.mxu0
        %v927 = vadd.f32 %v797, %v926
        %v928 = vpop.f32.mrf.mxu0
        %v929 = vpop.f32.mrf.mxu0
        %v930 = vadd.f32 %v797, %v929
        %v931 = vpop.f32.mrf.mxu0
        %932 = vdwg.mxu0
        %933 = vst [vmem:[%s270] sm:$0xff] %v871
        %934 = vst [vmem:[%s270 + $0x8] sm:$0xff] %v874
        %935 = vst [vmem:[%s270 + $0x10] sm:$0xff] %v879
        %936 = vst [vmem:[%s270 + $0x18] sm:$0xff] %v882
        %937 = vst [vmem:[%s270 + $0x20] sm:$0xff] %v887
        %938 = vst [vmem:[%s270 + $0x28] sm:$0xff] %v890
        %939 = vst [vmem:[%s270 + $0x30] sm:$0xff] %v895
        %940 = vst [vmem:[%s270 + $0x38] sm:$0xff] %v898
        %941 = vst [vmem:[%s270 + $0x40] sm:$0xff] %v903
        %942 = vst [vmem:[%s270 + $0x48] sm:$0xff] %v906
        %943 = vst [vmem:[%s270 + $0x50] sm:$0xff] %v911
        %944 = vst [vmem:[%s270 + $0x58] sm:$0xff] %v914
        %945 = vst [vmem:[%s270 + $0x60] sm:$0xff] %v919
        %946 = vst [vmem:[%s270 + $0x68] sm:$0xff] %v922
        %947 = vst [vmem:[%s270 + $0x70] sm:$0xff] %v927
        %948 = vst [vmem:[%s270 + $0x78] sm:$0xff] %v930
        %s949 = sand.u32 %s162, 1
        %s950 = scalar_lea.sflag [#allocation4], %s949
        %s951 = sand.u32 %s162, 1
        %s952 = smul.addr %s951, 128
        %s953 = scalar_lea.vmem [#allocation5], %s952
        // Predicated region
        $region49: #{tpu_custom_call.1} parent=43 // pred_check
          %p954 = pneg %p172
        $region50: #{tpu_custom_call.1} parent=43 // pred_check_branch
          %956 = sbr.rel (%p954) target = $region52
        $region51: #{tpu_custom_call.1} parent=43 // pred_region
          %s957 = smul.u32 16, %s23
          %s959 = ssub.s32 2048, 2048
          %960 = vsyncadd %s950, %s959
          %s961 = smul.addr %s957, 128
          %s962 = scalar_lea.hbm %s6, %s961
          %s963 = sshll.u32 %s953, 4
          %s964 = int_to_ptr.vmem [resolvable:$true] %s963
          %969 = dma.vmem_to_hbm [thread:$0]  %s964, 2048, %s962, %s950, 128, 128, 8
        $region52: #{tpu_custom_call.1} parent=43 // pred_fallthru
          _
      $region44: #{tpu_custom_call.1} parent=5 // pred_fallthru
        _
      %p970 = scmp.le.s32.totalorder 2, %s18
      // Predicated region
      $region53: #{tpu_custom_call.1} parent=5 // pred_check
        %p971 = pneg %p970
      $region54: #{tpu_custom_call.1} parent=5 // pred_check_branch
        %973 = sbr.rel (%p971) target = $region56
      $region55: #{tpu_custom_call.1} parent=5 // pred_region
        %s974 = ssub.s32 %s18, 2
        // Predicated region
        $region57: #{tpu_custom_call.1} parent=55 // pred_check
          %p975 = pneg %p178
        $region58: #{tpu_custom_call.1} parent=55 // pred_check_branch
          %977 = sbr.rel (%p975) target = $region60
        $region59: #{tpu_custom_call.1} parent=55 // pred_region
          %s978 = sand.u32 %s163, 1
          %s979 = scalar_lea.sflag [#allocation4], %s978
          %s980 = sand.u32 %s163, 1
          %s981 = smul.addr %s980, 128
          %s982 = scalar_lea.vmem [#allocation5], %s981
          %983 = dma.done %s979, 2048
        $region60: #{tpu_custom_call.1} parent=55 // pred_fallthru
          _
      $region56: #{tpu_custom_call.1} parent=5 // pred_fallthru
        _
    $region6: #{tpu_custom_call.1} parent=1 // loop_footer
      %s22 = sadd.s32 1, %s18
    $region7: #{tpu_custom_call.1} parent=1 // loop_footer_branch
      %17 = sbr.rel target = $region3
    $region8: #{tpu_custom_call.1} parent=1 // loop_exit
      _
    %984 = vsyncpa [#allocation3], 1
    %s985 = scalar_lea.sflag [#allocation3], 1
    %986 = vsyncpa %s985, 1
    %987 = vsyncpa [#allocation4], 1
    %s988 = scalar_lea.sflag [#allocation4], 1
    %989 = vsyncpa %s988, 1

</llo_original>
